<compile_context>
chip_gen: v6e
topology: v6e:2x2x1
jax: 0.10.0
libtpu: 0.0.40
codegen_flags: <defaults>
</compile_context>

<pallas_src>
import jax
import jax.numpy as jnp
from jax.experimental import pallas as pl
from jax.experimental.pallas import tpu as pltpu

CIN = 3
COUT = 8
PAD = 1

# Max pixels (rows * W) per grid step: ~11.5 MiB of double-buffered blocks,
# comfortably inside the scoped-VMEM limit below on v5e/v6e/v7x.
_PIX_PER_STEP = 128 * 1024
_VMEM_LIMIT = 48 * 1024 * 1024


def _make_kernel(h_out):
    def kernel(xm_ref, xl_ref, w_ref, b_ref, o_ref):
        # xm_ref: (1, CIN, TR_IN, W)  input rows [j*TR, j*TR + TR_IN)
        # xl_ref: (1, CIN, LB, W)     lookback block; row LB-1 == input row j*TR-1
        # w_ref:  (CIN, COUT, 1)      weights pre-scaled by 1/6
        # b_ref:  (COUT, 1)           bias pre-scaled by 1/6
        # o_ref:  (1, COUT, TR_OUT, Wo)  padded-output rows [j*TR, j*TR + TR_OUT)
        j = pl.program_id(1)
        cin, tr_in, _ = xm_ref.shape[1], xm_ref.shape[2], xm_ref.shape[3]
        tr_out = o_ref.shape[2]
        lb = xl_ref.shape[2]

        xm = xm_ref[0]  # (CIN, TR_IN, W)
        if tr_in == tr_out:
            # Output row g = j*TR + t uses input row g-1: shift the block down
            # one row; the missing first row comes from the lookback block.
            prev = xl_ref[0][:, lb - 1:lb, :]                      # (CIN, 1, W)
            rows = jnp.concatenate([prev, xm[:, :tr_in - 1, :]], axis=1)
        else:
            # Tiny-image path (single full-extent row block). Rows 0 / Ho-1 are
            # placeholders; the border mask below zeroes them.
            rows = jnp.concatenate([xm[:, :1, :], xm, xm[:, :1, :]], axis=1)

        # Zero the rows that belong to the padded border (top/bottom): the 1x1
        # conv of an all-zero patch then gives relu(bias)/6 there automatically.
        g = j * tr_out + jax.lax.broadcasted_iota(jnp.int32, (tr_out, 1), 0)
        is_border_row = jnp.logical_or(g == 0, g == h_out - 1)     # (TR_OUT, 1)
        rows = jnp.where(is_border_row[None, :, :], 0.0, rows)

        # Column padding: widen with zero columns (same trick as the rows).
        zc = jnp.zeros((cin, tr_out, PAD), jnp.float32)
        s = jnp.concatenate([zc, rows, zc], axis=2)                # (CIN, TR_OUT, Wo)

        # 1x1 conv == CIN scalar-broadcast FMAs per output channel on the VPU.
        # TODO(synk): if a v7x bundle dump shows the VALU slot binding, move
        # this 3->8 projection to the MXU (jnp.dot) and keep only relu+store
        # on the VPU / store slots; HBM-bound on v5e/v6e so left on the VPU.
        acc = b_ref[...][:, :, None]                               # (COUT, 1, 1)
        for k in range(cin):
            acc = acc + w_ref[k][:, :, None] * s[k][None, :, :]    # (COUT,TR,Wo)
        o_ref[0] = jnp.maximum(acc, 0.0).astype(o_ref.dtype)

    return kernel


def _row_block(n, h, w, h_out):
    """Output rows per grid step: multiple of 8, <= H, ~_PIX_PER_STEP pixels."""
    cap = max(8, ((_PIX_PER_STEP // max(w, 1)) // 8) * 8)
    tr = min((h // 8) * 8, cap)
    if n == 1:
        # Balance the (>=2) row blocks so both v7x TensorCores get similar
        # byte counts; no-op once there are already many row blocks.
        balanced = pl.cdiv(pl.cdiv(h_out, 2), 8) * 8
        tr = min(tr, max(8, balanced))
    return max(8, tr)


def model_forward(x, weight, bias):
    """x: (N, 3, H, W) f32 NCHW; weight: (8, 3, 1, 1); bias: (8,)."""
    n, cin, h, w = x.shape
    assert cin == CIN
    h_out, w_out = h + 2 * PAD, w + 2 * PAD

    # Fold the .div(6) into the parameters (relu is positively homogeneous).
    w6 = (weight.reshape(COUT, CIN).T / 6.0).reshape(CIN, COUT, 1)  # (CIN, COUT, 1)
    b6 = (bias / 6.0).reshape(COUT, 1)                              # (COUT, 1)

    if h >= 8:
        tr_out = _row_block(n, h, w, h_out)
        tr_in, lb = tr_out, 8
    else:
        tr_out, tr_in, lb = h_out, h, h  # tiny images: one full-extent row block

    row_blocks = pl.cdiv(h_out, tr_out)      # >= 2 whenever h >= 8 (tr_out <= h < h_out)
    in_row_blocks = pl.cdiv(h, tr_in)
    lb_blocks = pl.cdiv(h, lb)
    step = max(tr_out // lb, 1)

    def xm_map(i, j):
        # Clamp: blocks past the input's bottom are never read for real rows.
        return (i, 0, jnp.minimum(j, in_row_blocks - 1), 0)

    def xl_map(i, j):
        # 8-row block containing input row j*tr_out - 1 (its last row).
        return (i, 0, jnp.clip(j * step - 1, 0, lb_blocks - 1), 0)

    out = pl.pallas_call(
        _make_kernel(h_out),
        out_shape=jax.ShapeDtypeStruct((n, COUT, h_out, w_out), jnp.float32),
        grid_spec=pltpu.PrefetchScalarGridSpec(
            num_scalar_prefetch=0,
            grid=(n, row_blocks),
            in_specs=[
                pl.BlockSpec((1, CIN, tr_in, w), xm_map),
                pl.BlockSpec((1, CIN, lb, w), xl_map),
                # Constant block index -> fetched once, kept resident.
                pl.BlockSpec((CIN, COUT, 1), lambda i, j: (0, 0, 0)),
                pl.BlockSpec((COUT, 1), lambda i, j: (0, 0)),
            ],
            out_specs=pl.BlockSpec((1, COUT, tr_out, w_out),
                                   lambda i, j: (i, 0, j, 0)),
        ),
        compiler_params=pltpu.CompilerParams(
            dimension_semantics=("parallel", "parallel"),
            vmem_limit_bytes=_VMEM_LIMIT,
        ),
    )(x, x, w6, b6)
    return out


if __name__ == "__main__":
    key = jax.random.PRNGKey(0)
    kx, kw, kb = jax.random.split(key, 3)

    # Small shapes consistent with the module: N=2, Cin=3, spatial 16x16.
    N, H, W = 2, 16, 16
    x = jax.random.normal(kx, (N, CIN, H, W), dtype=jnp.float32)
    weight = 0.1 * jax.random.normal(kw, (COUT, CIN, 1, 1), dtype=jnp.float32)
    bias = 0.1 * jax.random.normal(kb, (COUT,), dtype=jnp.float32)

    fwd = jax.jit(model_forward)
    out = jax.block_until_ready(fwd(x, weight, bias))

    # Pure-JAX reference.
    ref = jax.lax.conv_general_dilated(
        x, weight, window_strides=(1, 1), padding=((PAD, PAD), (PAD, PAD)),
        dimension_numbers=("NCHW", "OIHW", "NCHW"))
    ref = jnp.maximum(ref + bias.reshape(1, COUT, 1, 1), 0.0) / 6.0

    assert out.shape == (N, COUT, H + 2 * PAD, W + 2 * PAD), out.shape
    err = float(jnp.max(jnp.abs(out - ref)))
    assert jnp.allclose(out, ref, atol=1e-5, rtol=1e-5), err
    print("KERNEL_OK")
</pallas_src>

<mosaic_0001>
module attributes {stable_mosaic.version = 11 : i64} {
  func.func @kernel(%arg0: i32, %arg1: i32, %arg2: memref<1x3x16x16xf32, #tpu.memory_space<vmem>>, %arg3: memref<1x3x8x16xf32, #tpu.memory_space<vmem>>, %arg4: memref<3x8x1xf32, #tpu.memory_space<vmem>>, %arg5: memref<8x1xf32, #tpu.memory_space<vmem>>, %arg6: memref<1x8x16x18xf32, #tpu.memory_space<vmem>>) attributes {dimension_semantics = [#tpu.dimension_semantics<parallel>, #tpu.dimension_semantics<parallel>], iteration_bounds = array<i64: 2, 2>, scalar_prefetch = 0 : i64, scratch_operands = 0 : i64, tpu.core_type = #tpu.core_type<tc>, window_params = [{transform_indices = @transform_0, window_bounds = array<i64: 1, 3, 16, 16>}, {transform_indices = @transform_1, window_bounds = array<i64: 1, 3, 8, 16>}, {pipeline_mode = #tpu.pipeline_mode<synchronous>, transform_indices = @transform_2, window_bounds = array<i64: 3, 8, 1>}, {pipeline_mode = #tpu.pipeline_mode<synchronous>, transform_indices = @transform_3, window_bounds = array<i64: 8, 1>}, {transform_indices = @transform_4, window_bounds = array<i64: 1, 8, 16, 18>}]} {
    %c0 = arith.constant 0 : index
    %c0_0 = arith.constant 0 : index
    %c0_1 = arith.constant 0 : index
    %c0_2 = arith.constant 0 : index
    %0 = vector.load %arg2[%c0, %c0_0, %c0_1, %c0_2] : memref<1x3x16x16xf32, #tpu.memory_space<vmem>>, vector<1x3x16x16xf32>
    %1 = vector.shape_cast %0 : vector<1x3x16x16xf32> to vector<3x16x16xf32>
    %c0_3 = arith.constant 0 : index
    %c0_4 = arith.constant 0 : index
    %c0_5 = arith.constant 0 : index
    %c0_6 = arith.constant 0 : index
    %2 = vector.load %arg3[%c0_3, %c0_4, %c0_5, %c0_6] : memref<1x3x8x16xf32, #tpu.memory_space<vmem>>, vector<1x3x8x16xf32>
    %3 = vector.shape_cast %2 : vector<1x3x8x16xf32> to vector<3x8x16xf32>
    %4 = vector.extract_strided_slice %3 {offsets = [0, 7, 0], sizes = [3, 1, 16], strides = [1, 1, 1]} : vector<3x8x16xf32> to vector<3x1x16xf32>
    %5 = vector.extract_strided_slice %1 {offsets = [0, 0, 0], sizes = [3, 15, 16], strides = [1, 1, 1]} : vector<3x16x16xf32> to vector<3x15x16xf32>
    %6 = tpu.concatenate %4, %5 in 1 : vector<3x1x16xf32>, vector<3x15x16xf32> -> vector<3x16x16xf32>
    %c16_i32 = arith.constant 16 : i32
    %7 = arith.muli %arg1, %c16_i32 : i32
    %8 = tpu.iota {dimensions = array<i32: 0>} : vector<16x1xi32>
    %9 = vector.broadcast %7 : i32 to vector<16x1xi32>
    %10 = arith.addi %9, %8 : vector<16x1xi32>
    %c0_i32 = arith.constant 0 : i32
    %11 = vector.broadcast %c0_i32 : i32 to vector<16x1xi32>
    %12 = arith.cmpi eq, %10, %11 : vector<16x1xi32>
    %c17_i32 = arith.constant 17 : i32
    %13 = vector.broadcast %c17_i32 : i32 to vector<16x1xi32>
    %14 = arith.cmpi eq, %10, %13 : vector<16x1xi32>
    %15 = arith.ori %12, %14 : vector<16x1xi1>
    %16 = vector.shape_cast %15 : vector<16x1xi1> to vector<1x16x1xi1>
    %cst = arith.constant 0.000000e+00 : f32
    %17 = vector.shape_cast %16 : vector<1x16x1xi1> to vector<1x16x1xi1>
    %18 = vector.broadcast %17 : vector<1x16x1xi1> to vector<3x16x16xi1>
    %19 = vector.broadcast %cst : f32 to vector<3x16x16xf32>
    %20 = arith.select %18, %19, %6 : vector<3x16x16xi1>, vector<3x16x16xf32>
    %cst_7 = arith.constant 0.000000e+00 : f32
    %21 = vector.broadcast %cst_7 : f32 to vector<3x16x1xf32>
    %22 = tpu.concatenate %21, %20, %21 in 2 : vector<3x16x1xf32>, vector<3x16x16xf32>, vector<3x16x1xf32> -> vector<3x16x18xf32>
    %c0_8 = arith.constant 0 : index
    %c0_9 = arith.constant 0 : index
    %23 = vector.load %arg5[%c0_8, %c0_9] : memref<8x1xf32, #tpu.memory_space<vmem>>, vector<8x1xf32>
    %24 = vector.shape_cast %23 : vector<8x1xf32> to vector<8x1x1xf32>
    %c0_10 = arith.constant 0 : index
    %c0_11 = arith.constant 0 : index
    %c0_12 = arith.constant 0 : index
    %25 = vector.load %arg4[%c0_10, %c0_11, %c0_12] : memref<3x8x1xf32, #tpu.memory_space<vmem>>, vector<1x8x1xf32>
    %26 = vector.shape_cast %25 : vector<1x8x1xf32> to vector<8x1xf32>
    %27 = vector.shape_cast %26 : vector<8x1xf32> to vector<8x1x1xf32>
    %28 = vector.extract_strided_slice %22 {offsets = [0, 0, 0], sizes = [1, 16, 18], strides = [1, 1, 1]} : vector<3x16x18xf32> to vector<1x16x18xf32>
    %29 = vector.shape_cast %28 : vector<1x16x18xf32> to vector<16x18xf32>
    %30 = vector.shape_cast %29 : vector<16x18xf32> to vector<1x16x18xf32>
    %31 = vector.broadcast %27 : vector<8x1x1xf32> to vector<8x16x18xf32>
    %32 = vector.broadcast %30 : vector<1x16x18xf32> to vector<8x16x18xf32>
    %33 = arith.mulf %31, %32 : vector<8x16x18xf32>
    %34 = vector.broadcast %24 : vector<8x1x1xf32> to vector<8x16x18xf32>
    %35 = arith.addf %34, %33 : vector<8x16x18xf32>
    %c1 = arith.constant 1 : index
    %c0_13 = arith.constant 0 : index
    %c0_14 = arith.constant 0 : index
    %36 = vector.load %arg4[%c1, %c0_13, %c0_14] : memref<3x8x1xf32, #tpu.memory_space<vmem>>, vector<1x8x1xf32>
    %37 = vector.shape_cast %36 : vector<1x8x1xf32> to vector<8x1xf32>
    %38 = vector.shape_cast %37 : vector<8x1xf32> to vector<8x1x1xf32>
    %39 = vector.extract_strided_slice %22 {offsets = [1, 0, 0], sizes = [1, 16, 18], strides = [1, 1, 1]} : vector<3x16x18xf32> to vector<1x16x18xf32>
    %40 = vector.shape_cast %39 : vector<1x16x18xf32> to vector<16x18xf32>
    %41 = vector.shape_cast %40 : vector<16x18xf32> to vector<1x16x18xf32>
    %42 = vector.broadcast %38 : vector<8x1x1xf32> to vector<8x16x18xf32>
    %43 = vector.broadcast %41 : vector<1x16x18xf32> to vector<8x16x18xf32>
    %44 = arith.mulf %42, %43 : vector<8x16x18xf32>
    %45 = arith.addf %35, %44 : vector<8x16x18xf32>
    %c2 = arith.constant 2 : index
    %c0_15 = arith.constant 0 : index
    %c0_16 = arith.constant 0 : index
    %46 = vector.load %arg4[%c2, %c0_15, %c0_16] : memref<3x8x1xf32, #tpu.memory_space<vmem>>, vector<1x8x1xf32>
    %47 = vector.shape_cast %46 : vector<1x8x1xf32> to vector<8x1xf32>
    %48 = vector.shape_cast %47 : vector<8x1xf32> to vector<8x1x1xf32>
    %49 = vector.extract_strided_slice %22 {offsets = [2, 0, 0], sizes = [1, 16, 18], strides = [1, 1, 1]} : vector<3x16x18xf32> to vector<1x16x18xf32>
    %50 = vector.shape_cast %49 : vector<1x16x18xf32> to vector<16x18xf32>
    %51 = vector.shape_cast %50 : vector<16x18xf32> to vector<1x16x18xf32>
    %52 = vector.broadcast %48 : vector<8x1x1xf32> to vector<8x16x18xf32>
    %53 = vector.broadcast %51 : vector<1x16x18xf32> to vector<8x16x18xf32>
    %54 = arith.mulf %52, %53 : vector<8x16x18xf32>
    %55 = arith.addf %45, %54 : vector<8x16x18xf32>
    %cst_17 = arith.constant 0.000000e+00 : f32
    %56 = vector.broadcast %cst_17 : f32 to vector<8x16x18xf32>
    %57 = arith.maximumf %55, %56 : vector<8x16x18xf32>
    %c0_18 = arith.constant 0 : index
    %c0_19 = arith.constant 0 : index
    %c0_20 = arith.constant 0 : index
    %c0_21 = arith.constant 0 : index
    %58 = vector.load %arg6[%c0_18, %c0_19, %c0_20, %c0_21] : memref<1x8x16x18xf32, #tpu.memory_space<vmem>>, vector<1x8x16x18xf32>
    %59 = vector.shape_cast %58 : vector<1x8x16x18xf32> to vector<8x16x18xf32>
    %60 = vector.shape_cast %57 : vector<8x16x18xf32> to vector<1x8x16x18xf32>
    tpu.vector_store %arg6[%c0_18, %c0_19, %c0_20, %c0_21], %60 {strides = array<i32>} : memref<1x8x16x18xf32, #tpu.memory_space<vmem>>, vector<1x8x16x18xf32>,
    return
  }
  func.func @transform_0(%arg0: i32, %arg1: i32) -> (i32, i32, i32, i32) {
    %c0_i32 = arith.constant 0 : i32
    %0 = arith.minsi %arg1, %c0_i32 : i32
    %c0_i32_0 = arith.constant 0 : i32
    %c0_i32_1 = arith.constant 0 : i32
    %c0_i32_2 = arith.constant 0 : i32
    return %arg0, %c0_i32_0, %0, %c0_i32_1 : i32, i32, i32, i32
  }
  func.func @transform_1(%arg0: i32, %arg1: i32) -> (i32, i32, i32, i32) {
    %c2_i32 = arith.constant 2 : i32
    %0 = arith.muli %arg1, %c2_i32 : i32
    %c1_i32 = arith.constant 1 : i32
    %1 = arith.subi %0, %c1_i32 : i32
    %c0_i32 = arith.constant 0 : i32
    %c1_i32_0 = arith.constant 1 : i32
    %2 = arith.maxsi %c0_i32, %1 : i32
    %3 = arith.minsi %c1_i32_0, %2 : i32
    %c0_i32_1 = arith.constant 0 : i32
    %c0_i32_2 = arith.constant 0 : i32
    %c0_i32_3 = arith.constant 0 : i32
    return %arg0, %c0_i32_1, %3, %c0_i32_2 : i32, i32, i32, i32
  }
  func.func @transform_2(%arg0: i32, %arg1: i32) -> (i32, i32, i32) {
    %c0_i32 = arith.constant 0 : i32
    %c0_i32_0 = arith.constant 0 : i32
    %c0_i32_1 = arith.constant 0 : i32
    %c0_i32_2 = arith.constant 0 : i32
    return %c0_i32, %c0_i32_0, %c0_i32_1 : i32, i32, i32
  }
  func.func @transform_3(%arg0: i32, %arg1: i32) -> (i32, i32) {
    %c0_i32 = arith.constant 0 : i32
    %c0_i32_0 = arith.constant 0 : i32
    %c0_i32_1 = arith.constant 0 : i32
    return %c0_i32, %c0_i32_0 : i32, i32
  }
  func.func @transform_4(%arg0: i32, %arg1: i32) -> (i32, i32, i32, i32) {
    %c0_i32 = arith.constant 0 : i32
    %c0_i32_0 = arith.constant 0 : i32
    %c0_i32_1 = arith.constant 0 : i32
    return %arg0, %c0_i32, %arg1, %c0_i32_0 : i32, i32, i32, i32
  }
}

</mosaic_0001>

<llo_original>
// kernel: model_forward.1
$region0: #{model_forward.1}
  #allocation0 [shape = 'u32[]', space=smem, size = 0x4, offset = 0x4, fixed_abs, tag = 'smem constant byte address 0x4 - core index']
  #allocation1 [shape = 'u32[144,128]{1,0:T(1,128)}', space=vmem, size = 0x12000, scoped, tag = 'internal scratch']
  %s0 = inlined_call_operand.hbm [shape: f32[2,3,16,16], index: 0, kind: input, shape index: {}, may-alias: {0,1}]
  %s1 = inlined_call_operand.hbm [shape: f32[2,3,16,16], index: 1, kind: input, shape index: {}, may-alias: {0,1}]
  %s2 = inlined_call_operand.vmem [shape: f32[3,8,1], index: 2, kind: input, shape index: {}]
  %s3 = inlined_call_operand.vmem [shape: f32[8,1], index: 3, kind: input, shape index: {}]
  %s4 = inlined_call_operand.vmem [shape: f32[2,8,18,18], index: 4, kind: output, shape index: {}]
  %s5 = sld [smem:[#allocation0]]
  $region105: #{model_forward.1} parent=0
    _
  %s7 = ssub.s32 1, %s5
  %s8 = scalar_select 0, %s7, %s5
  $region1: #{model_forward.1} parent=0
    #allocation2 [shape = 'u8[49152]{0}', space=vmem, size = 0xc000, scoped, tag = 'input window, operand 0']
    #allocation3 [shape = 's32[2]{0}', space=sflag, size = 0x8, scoped, tag = 'scoped memory for model_forward.1']
    #allocation4 [shape = 'u8[24576]{0}', space=vmem, size = 0x6000, scoped, tag = 'input window, operand 1']
    #allocation5 [shape = 's32[2]{0}', space=sflag, size = 0x8, scoped, tag = 'scoped memory for model_forward.1']
    #allocation6 [shape = 'u8[131072]{0}', space=vmem, size = 0x20000, scoped, tag = 'output window, operand 0']
    %9 = vsyncpa [#allocation3], 0
    %s10 = scalar_lea.sflag [#allocation3], 1
    %11 = vsyncpa %s10, 0
    %12 = vsyncpa [#allocation5], 0
    %s13 = scalar_lea.sflag [#allocation5], 1
    %14 = vsyncpa %s13, 0
    loop: start=0, step=1, limit=6
    $region2: #{model_forward.1} parent=1 // loop_pre_header
      _
    $region3: #{model_forward.1} parent=1 // loop_header
      %s16 = sphi 0, %s20
      %p17 = scmp.ge.s32.totalorder %s16, 6
      %s23 = sphi 0, %s35
      %s24 = sphi 0, %s31
      %s25 = sphi 0, %s23
      %s26 = sphi 0, %s24
      %s27 = sphi 0, %s25
      %s28 = sphi 0, %s26
      %s44 = sphi 0, %s46
      %s47 = sphi 0, %s44
      %s48 = sphi 0, %s47
      %s64 = sphi 0, %s48
      %s84 = sphi 0, %s86
      %s87 = sphi 0, %s84
      %s88 = sphi 0, %s87
      %s104 = sphi 0, %s88
      %s108 = sphi 0, %s108
      %s110 = sphi 0, %s108
      %s111 = sphi 0, %s110
      %s125 = sphi 0, %s111
      %s129 = sphi 0, %s129
      %s131 = sphi 0, %s129
      %s132 = sphi 0, %s131
      %s146 = sphi 0, %s132
      %s154 = sphi 0, %s156
      %s157 = sphi 0, %s154
      %s158 = sphi 0, %s157
      %s174 = sphi 0, %s158
    $region4: #{model_forward.1} parent=1 // loop_header_branch
      %19 = sbr.rel (%p17) target = $region8
    $region5: #{model_forward.1} parent=1 // loop_body
      %s21 = ssub.s32 %s16, 1
      %s22 = ssub.s32 %s16, 2
      %s29 = sadd.s32 1, %s24
      %p30 = scmp.ge.s32.totalorder %s29, 2
      %s31 = scalar_select %p30, 0, %s29
      %s32 = sadd.s32 1, %s23
      %s33 = scalar_select %p30, %s32, %s23
      %p34 = scmp.ge.s32.totalorder %s33, 2
      %s35 = scalar_select %p34, 0, %s33
      %p36 = scmp.lt.s32.totalorder %s24, 0
      %s37 = scalar_select %p36, %s24, 0
      %p38 = scmp.lt.s32.totalorder %s31, 0
      %s39 = scalar_select %p38, %s31, 0
      %s40 = ssub.s32 %s23, %s35
      %s41 = ssub.s32 %s37, %s39
      %s42 = sor.u32 %s40, %s41
      %p43 = scmp.eq.s32.totalorder %s42, 0
      %s45 = sadd.s32 %s44, 1
      %s46 = scalar_select %p43, %s44, %s45
      %p49 = pneg %p43
      %p50 = scmp.eq.s32.totalorder %s16, 3
      %p51 = por %p49, %p50
      %p52 = scmp.ne.s32.totalorder %s44, %s47
      %p53 = scmp.eq.s32.totalorder %s16, 0
      %p54 = por %p52, %p53
      %p55 = scmp.ne.s32.totalorder %s44, %s47
      %p56 = scmp.eq.s32.totalorder %s21, 3
      %p57 = por %p55, %p56
      %p58 = scmp.ne.s32.totalorder %s47, %s48
      %p59 = scmp.eq.s32.totalorder %s21, 0
      %p60 = por %p58, %p59
      %p61 = scmp.ne.s32.totalorder %s47, %s48
      %p62 = scmp.eq.s32.totalorder %s22, 3
      %p63 = por %p61, %p62
      %p65 = scmp.ne.s32.totalorder %s48, %s64
      %p66 = scmp.eq.s32.totalorder %s22, 0
      %p67 = por %p65, %p66
      %s68 = smul.u32 %s24, 2
      %s69 = ssub.s32 %s68, 1
      %p70 = scmp.gt.s32.totalorder %s69, 0
      %s71 = scalar_select %p70, %s69, 0
      %p72 = scmp.lt.s32.totalorder %s71, 1
      %s73 = scalar_select %p72, %s71, 1
      %s74 = smul.u32 %s31, 2
      %s75 = ssub.s32 %s74, 1
      %p76 = scmp.gt.s32.totalorder %s75, 0
      %s77 = scalar_select %p76, %s75, 0
      %p78 = scmp.lt.s32.totalorder %s77, 1
      %s79 = scalar_select %p78, %s77, 1
      %s80 = ssub.s32 %s23, %s35
      %s81 = ssub.s32 %s73, %s79
      %s82 = sor.u32 %s80, %s81
      %p83 = scmp.eq.s32.totalorder %s82, 0
      %s85 = sadd.s32 %s84, 1
      %s86 = scalar_select %p83, %s84, %s85
      %p89 = pneg %p83
      %p90 = scmp.eq.s32.totalorder %s16, 3
      %p91 = por %p89, %p90
      %p92 = scmp.ne.s32.totalorder %s84, %s87
      %p93 = scmp.eq.s32.totalorder %s16, 0
      %p94 = por %p92, %p93
      %p95 = scmp.ne.s32.totalorder %s84, %s87
      %p96 = scmp.eq.s32.totalorder %s21, 3
      %p97 = por %p95, %p96
      %p98 = scmp.ne.s32.totalorder %s87, %s88
      %p99 = scmp.eq.s32.totalorder %s21, 0
      %p100 = por %p98, %p99
      %p101 = scmp.ne.s32.totalorder %s87, %s88
      %p102 = scmp.eq.s32.totalorder %s22, 3
      %p103 = por %p101, %p102
      %p105 = scmp.ne.s32.totalorder %s88, %s104
      %p106 = scmp.eq.s32.totalorder %s22, 0
      %p107 = por %p105, %p106
      %s109 = sadd.s32 %s108, 1
      %p112 = scmp.eq.s32.totalorder %s16, 3
      %p113 = scmp.ne.s32.totalorder %s108, %s110
      %p114 = scmp.eq.s32.totalorder %s16, 0
      %p115 = por %p113, %p114
      %p116 = scmp.ne.s32.totalorder %s108, %s110
      %p117 = scmp.eq.s32.totalorder %s21, 3
      %p118 = por %p116, %p117
      %p119 = scmp.ne.s32.totalorder %s110, %s111
      %p120 = scmp.eq.s32.totalorder %s21, 0
      %p121 = por %p119, %p120
      %p122 = scmp.ne.s32.totalorder %s110, %s111
      %p123 = scmp.eq.s32.totalorder %s22, 3
      %p124 = por %p122, %p123
      %p126 = scmp.ne.s32.totalorder %s111, %s125
      %p127 = scmp.eq.s32.totalorder %s22, 0
      %p128 = por %p126, %p127
      %s130 = sadd.s32 %s129, 1
      %p133 = scmp.eq.s32.totalorder %s16, 3
      %p134 = scmp.ne.s32.totalorder %s129, %s131
      %p135 = scmp.eq.s32.totalorder %s16, 0
      %p136 = por %p134, %p135
      %p137 = scmp.ne.s32.totalorder %s129, %s131
      %p138 = scmp.eq.s32.totalorder %s21, 3
      %p139 = por %p137, %p138
      %p140 = scmp.ne.s32.totalorder %s131, %s132
      %p141 = scmp.eq.s32.totalorder %s21, 0
      %p142 = por %p140, %p141
      %p143 = scmp.ne.s32.totalorder %s131, %s132
      %p144 = scmp.eq.s32.totalorder %s22, 3
      %p145 = por %p143, %p144
      %p147 = scmp.ne.s32.totalorder %s132, %s146
      %p148 = scmp.eq.s32.totalorder %s22, 0
      %p149 = por %p147, %p148
      %s150 = ssub.s32 %s23, %s35
      %s151 = ssub.s32 %s24, %s31
      %s152 = sor.u32 %s150, %s151
      %p153 = scmp.eq.s32.totalorder %s152, 0
      %s155 = sadd.s32 %s154, 1
      %s156 = scalar_select %p153, %s154, %s155
      %p159 = pneg %p153
      %p160 = scmp.eq.s32.totalorder %s16, 3
      %p161 = por %p159, %p160
      %p162 = scmp.ne.s32.totalorder %s154, %s157
      %p163 = scmp.eq.s32.totalorder %s16, 0
      %p164 = por %p162, %p163
      %p165 = scmp.ne.s32.totalorder %s154, %s157
      %p166 = scmp.eq.s32.totalorder %s21, 3
      %p167 = por %p165, %p166
      %p168 = scmp.ne.s32.totalorder %s157, %s158
      %p169 = scmp.eq.s32.totalorder %s21, 0
      %p170 = por %p168, %p169
      %p171 = scmp.ne.s32.totalorder %s157, %s158
      %p172 = scmp.eq.s32.totalorder %s22, 3
      %p173 = por %p171, %p172
      %p175 = scmp.ne.s32.totalorder %s158, %s174
      %p176 = scmp.eq.s32.totalorder %s22, 0
      %p177 = por %p175, %p176
      %p178 = scmp.le.s32.totalorder 1, %s16
      %p179 = scmp.lt.s32.totalorder %s16, 5
      %p180 = pnand %p178, %p179
      %p181 = pneg %p180
      // Predicated region
      $region9: #{model_forward.1} parent=5 // pred_check
        _
      $region10: #{model_forward.1} parent=5 // pred_check_branch
        %183 = sbr.rel (%p180) target = $region12
      $region11: #{model_forward.1} parent=5 // pred_region
        %s184 = ssub.s32 %s16, 1
        // Predicated region
        $region13: #{model_forward.1} parent=11 // pred_check
          %p185 = pneg %p121
        $region14: #{model_forward.1} parent=11 // pred_check_branch
          %187 = sbr.rel (%p185) target = $region16
        $region15: #{model_forward.1} parent=11 // pred_region
          _
        $region16: #{model_forward.1} parent=11 // pred_fallthru
          _
        // Predicated region
        $region17: #{model_forward.1} parent=11 // pred_check
          %p188 = pneg %p142
        $region18: #{model_forward.1} parent=11 // pred_check_branch
          %190 = sbr.rel (%p188) target = $region20
        $region19: #{model_forward.1} parent=11 // pred_region
          _
        $region20: #{model_forward.1} parent=11 // pred_fallthru
          _
      $region12: #{model_forward.1} parent=5 // pred_fallthru
        _
      %p191 = scmp.lt.s32.totalorder %s16, 4
      // Predicated region
      $region21: #{model_forward.1} parent=5 // pred_check
        %p192 = pneg %p191
      $region22: #{model_forward.1} parent=5 // pred_check_branch
        %194 = sbr.rel (%p192) target = $region24
      $region23: #{model_forward.1} parent=5 // pred_region
        // Predicated region
        $region25: #{model_forward.1} parent=23 // pred_check
          %p195 = pneg %p54
        $region26: #{model_forward.1} parent=23 // pred_check_branch
          %197 = sbr.rel (%p195) target = $region28
        $region27: #{model_forward.1} parent=23 // pred_region
          %s198 = sand.u32 %s44, 1
          %s199 = scalar_lea.sflag [#allocation3], %s198
          %s200 = sand.u32 %s44, 1
          %s201 = smul.addr %s200, 48
          %s202 = scalar_lea.vmem [#allocation2], %s201
          %p203 = scmp.lt.s32.totalorder %s24, 0
          %s204 = scalar_select %p203, %s24, 0
          %s205 = smul.u32 2, %s204
          %s207 = ssub.s32 768, 768
          %208 = vsyncadd %s199, %s207
          %s209 = smul.addr %s23, 6
          %s210 = sadd.s32 %s205, %s209
          %s211 = smul.addr %s210, 128
          %s212 = scalar_lea.hbm %s0, %s211
          %s213 = sshll.u32 %s202, 4
          %s214 = int_to_ptr.vmem [resolvable:$true] %s213
          %219 = dma.hbm_to_vmem [thread:$0]  %s212, 768, %s214, %s199, 128, 128, 8
        $region28: #{model_forward.1} parent=23 // pred_fallthru
          _
        // Predicated region
        $region29: #{model_forward.1} parent=23 // pred_check
          %p220 = pneg %p94
        $region30: #{model_forward.1} parent=23 // pred_check_branch
          %222 = sbr.rel (%p220) target = $region32
        $region31: #{model_forward.1} parent=23 // pred_region
          %s223 = sand.u32 %s84, 1
          %s224 = scalar_lea.sflag [#allocation5], %s223
          %s225 = sand.u32 %s84, 1
          %s226 = smul.addr %s225, 24
          %s227 = scalar_lea.vmem [#allocation4], %s226
          %s228 = smul.u32 %s24, 2
          %s229 = ssub.s32 %s228, 1
          %p230 = scmp.gt.s32.totalorder %s229, 0
          %s231 = scalar_select %p230, %s229, 0
          %p232 = scmp.lt.s32.totalorder %s231, 1
          %s233 = scalar_select %p232, %s231, 1
          %s235 = ssub.s32 384, 384
          %236 = vsyncadd %s224, %s235
          %s237 = smul.addr %s23, 6
          %s238 = sadd.s32 %s233, %s237
          %s239 = smul.addr %s238, 128
          %s240 = scalar_lea.hbm %s1, %s239
          %s241 = sshll.u32 %s227, 4
          %s242 = int_to_ptr.vmem [resolvable:$true] %s241
          %247 = dma.hbm_to_vmem [thread:$0]  %s240, 384, %s242, %s224, 256, 128, 8
        $region32: #{model_forward.1} parent=23 // pred_fallthru
          _
      $region24: #{model_forward.1} parent=5 // pred_fallthru
        _
      %p248 = scmp.le.s32.totalorder 1, %s16
      %p249 = scmp.lt.s32.totalorder %s16, 5
      %p250 = pnand %p248, %p249
      %p251 = pneg %p250
      // Predicated region
      $region33: #{model_forward.1} parent=5 // pred_check
        _
      $region34: #{model_forward.1} parent=5 // pred_check_branch
        %253 = sbr.rel (%p250) target = $region36
      $region35: #{model_forward.1} parent=5 // pred_region
        %s254 = ssub.s32 %s16, 1
        %s255 = sand.u32 %s47, 1
        %s256 = scalar_lea.sflag [#allocation3], %s255
        %s257 = sand.u32 %s47, 1
        %s258 = smul.addr %s257, 48
        %s259 = scalar_lea.vmem [#allocation2], %s258
        // Predicated region
        $region37: #{model_forward.1} parent=35 // pred_check
          %p260 = pneg %p60
        $region38: #{model_forward.1} parent=35 // pred_check_branch
          %262 = sbr.rel (%p260) target = $region40
        $region39: #{model_forward.1} parent=35 // pred_region
          %263 = dma.done %s256, 768
        $region40: #{model_forward.1} parent=35 // pred_fallthru
          _
        %s264 = sand.u32 %s87, 1
        %s265 = scalar_lea.sflag [#allocation5], %s264
        %s266 = sand.u32 %s87, 1
        %s267 = smul.addr %s266, 24
        %s268 = scalar_lea.vmem [#allocation4], %s267
        // Predicated region
        $region41: #{model_forward.1} parent=35 // pred_check
          %p269 = pneg %p100
        $region42: #{model_forward.1} parent=35 // pred_check_branch
          %271 = sbr.rel (%p269) target = $region44
        $region43: #{model_forward.1} parent=35 // pred_region
          %272 = dma.done %s265, 384
        $region44: #{model_forward.1} parent=35 // pred_fallthru
          _
        %s273 = sand.u32 %s47, 1
        %s274 = scalar_lea.sflag [#allocation3], %s273
        %s275 = sand.u32 %s47, 1
        %s276 = smul.addr %s275, 48
        %s277 = scalar_lea.vmem [#allocation2], %s276
        %p278 = pneg %p60
        %p279 = pneg %p57
        %s280 = sand.u32 %s87, 1
        %s281 = scalar_lea.sflag [#allocation5], %s280
        %s282 = sand.u32 %s87, 1
        %s283 = smul.addr %s282, 24
        %s284 = scalar_lea.vmem [#allocation4], %s283
        %p285 = pneg %p100
        %p286 = pneg %p97
        %p287 = pneg %p121
        %p288 = pneg %p118
        %p289 = pneg %p142
        %p290 = pneg %p139
        %p291 = pneg %p170
        %p292 = pneg %p167
        %s293 = sand.u32 %s157, 1
        %s294 = sand.u32 %s157, 1
        %s295 = smul.addr %s294, 128
        %s296 = scalar_lea.vmem [#allocation6], %s295
        %p297 = scmp.lt.s32.totalorder %s26, 0
        %s298 = scalar_select %p297, %s26, 0
        %s299 = smul.u32 2, %s298
        %s300 = smul.u32 %s26, 2
        %s301 = ssub.s32 %s300, 1
        %p302 = scmp.gt.s32.totalorder %s301, 0
        %s303 = scalar_select %p302, %s301, 0
        %p304 = scmp.lt.s32.totalorder %s303, 1
        %s305 = scalar_select %p304, %s303, 1
        %s306 = smul.u32 2, %s26
        %s307 = ssub.s32 3, %s306
        %p308 = scmp.lt.s32.totalorder %s307, 2
        %s309 = scalar_select %p308, %s307, 2
        %s310 = smul.u32 1024, %s309
        %v311 = vld [vmem:[%s259] sm:$0xff]
        %v312 = vld [vmem:[%s259 + $0x8] sm:$0xff]
        %v313 = vld [vmem:[%s259 + $0x10] sm:$0xff]
        %v314 = vld [vmem:[%s259 + $0x18] sm:$0xff]
        %v315 = vld [vmem:[%s259 + $0x20] sm:$0xff]
        %v316 = vld [vmem:[%s259 + $0x28] sm:$0xff]
        %v317 = vld [vmem:[%s268] sm:$0xff]
        %v318 = vld [vmem:[%s268 + $0x8] sm:$0xff]
        %v319 = vld [vmem:[%s268 + $0x10] sm:$0xff]
        %v323 = vrot.slane %v317, 7
        %v324 = vrot.slane %v318, 7
        %v325 = vrot.slane %v319, 7
        %vm335 = vcmask 1040384
        %v336 = vrot.slane %v311, 7
        %v337 = vrot.slane %v312, 7
        %v338 = vsel %vm335, %v336, %v337
        %v339 = vrot.slane %v313, 7
        %v340 = vrot.slane %v314, 7
        %v341 = vsel %vm335, %v339, %v340
        %v342 = vrot.slane %v315, 7
        %v343 = vrot.slane %v316, 7
        %v344 = vsel %vm335, %v342, %v343
        %v351 = vsel %vm335, %v323, %v336
        %v352 = vsel %vm335, %v324, %v339
        %v353 = vsel %vm335, %v325, %v342
        %s354 = smul.u32 %s26, 16
        %v355 = vlaneseq
        %v356 = vshrl.u32 %v355, 7
        %v357 = vadd.s32 %v356, 8
        %v358 = vstv %s354
        %v359 = vadd.s32 %v358, %v356
        %v360 = vadd.s32 %v358, %v357
        %vm361 = vcmp.eq.s32.totalorder %v359, 0
        %vm362 = vcmp.eq.s32.totalorder %v360, 0
        %vm363 = vcmp.eq.s32.totalorder %v359, 17
        %vm364 = vcmp.eq.s32.totalorder %v360, 17
        %vm365 = vmor %vm361, %vm363
        %vm366 = vmor %vm362, %vm364
        %v367 = vsel %vm365, 1, 0
        %v368 = vsel %vm366, 1, 0
        %vm369 = vcmp.eq.s32.totalorder %v367, 1
        %vm370 = vcmp.eq.s32.totalorder %v368, 1
        %v371 = vsel %vm369, 0.0, %v351
        %v372 = vsel %vm370, 0.0, %v338
        %v373 = vsel %vm369, 0.0, %v352
        %v374 = vsel %vm370, 0.0, %v341
        %v375 = vsel %vm369, 0.0, %v353
        %v376 = vsel %vm370, 0.0, %v344
        %383 = vrot.lane.b32.xlu0 %v371, 1
        %v384 = vpop.permute.xlu0 %383
        %385 = vrot.lane.b32.xlu0 %v372, 1
        %v386 = vpop.permute.xlu0 %385
        %387 = vrot.lane.b32.xlu0 %v373, 1
        %v388 = vpop.permute.xlu0 %387
        %389 = vrot.lane.b32.xlu0 %v374, 1
        %v390 = vpop.permute.xlu0 %389
        %391 = vrot.lane.b32.xlu0 %v375, 1
        %v392 = vpop.permute.xlu0 %391
        %393 = vrot.lane.b32.xlu0 %v376, 1
        %v394 = vpop.permute.xlu0 %393
        %vm401 = vcmask 7168
        %v402 = vsel %vm401, 0.0, %v384
        %v403 = vsel %vm401, 0.0, %v386
        %v404 = vsel %vm401, 0.0, %v388
        %v405 = vsel %vm401, 0.0, %v390
        %v406 = vsel %vm401, 0.0, %v392
        %v407 = vsel %vm401, 0.0, %v394
        %vm408 = vcmask 138240
        %v409 = vsel %vm408, %v402, 0.0
        %v410 = vsel %vm408, %v403, 0.0
        %v411 = vsel %vm408, %v404, 0.0
        %v412 = vsel %vm408, %v405, 0.0
        %v413 = vsel %vm408, %v406, 0.0
        %v414 = vsel %vm408, %v407, 0.0
        %v415 = vld [vmem:[%s3] sm:$0xff]
        %v417 = vcombine.high %v415, %v415
        %v419 = vunpack.c.l.s4 1966171168
        %v420 = vunpack.c.0.s8 %v419
        %v421 = vlaneseq
        %v422 = vshrl.u32 %v421, 7
        %v423 = vsub.s32 %v420, %v422
        %v424 = vrot.slane %v415, %v423
        %v426 = vunpack.c.l.s4 1966171168
        %v427 = vunpack.c.0.s8 %v426
        %v428 = vlaneseq
        %v429 = vshrl.u32 %v428, 7
        %v430 = vsub.s32 %v427, %v429
        %v431 = vrot.slane %v417, %v430
        %v432 = vcombine.high %v424, %v424
        %v433 = vcombine.high %v431, %v431
        %v435 = vunpack.c.l.s4 1966171168
        %v436 = vunpack.c.0.s8 %v435
        %v437 = vlaneseq
        %v438 = vshrl.u32 %v437, 7
        %v439 = vsub.s32 %v436, %v438
        %v440 = vrot.slane %v424, %v439
        %v442 = vunpack.c.l.s4 1966171168
        %v443 = vunpack.c.0.s8 %v442
        %v444 = vlaneseq
        %v445 = vshrl.u32 %v444, 7
        %v446 = vsub.s32 %v443, %v445
        %v447 = vrot.slane %v431, %v446
        %v449 = vunpack.c.l.s4 1966171168
        %v450 = vunpack.c.0.s8 %v449
        %v451 = vlaneseq
        %v452 = vshrl.u32 %v451, 7
        %v453 = vsub.s32 %v450, %v452
        %v454 = vrot.slane %v432, %v453
        %v456 = vunpack.c.l.s4 1966171168
        %v457 = vunpack.c.0.s8 %v456
        %v458 = vlaneseq
        %v459 = vshrl.u32 %v458, 7
        %v460 = vsub.s32 %v457, %v459
        %v461 = vrot.slane %v433, %v460
        %v462 = vcombine.high %v440, %v440
        %v463 = vcombine.high %v447, %v447
        %v464 = vcombine.high %v454, %v454
        %v465 = vcombine.high %v461, %v461
        %v466 = vld [vmem:[%s2] sm:$0xff]
        %v468 = vcombine.high %v466, %v466
        %v470 = vunpack.c.l.s4 1966171168
        %v471 = vunpack.c.0.s8 %v470
        %v472 = vlaneseq
        %v473 = vshrl.u32 %v472, 7
        %v474 = vsub.s32 %v471, %v473
        %v475 = vrot.slane %v466, %v474
        %v477 = vunpack.c.l.s4 1966171168
        %v478 = vunpack.c.0.s8 %v477
        %v479 = vlaneseq
        %v480 = vshrl.u32 %v479, 7
        %v481 = vsub.s32 %v478, %v480
        %v482 = vrot.slane %v468, %v481
        %v483 = vcombine.high %v475, %v475
        %v484 = vcombine.high %v482, %v482
        %v486 = vunpack.c.l.s4 1966171168
        %v487 = vunpack.c.0.s8 %v486
        %v488 = vlaneseq
        %v489 = vshrl.u32 %v488, 7
        %v490 = vsub.s32 %v487, %v489
        %v491 = vrot.slane %v475, %v490
        %v493 = vunpack.c.l.s4 1966171168
        %v494 = vunpack.c.0.s8 %v493
        %v495 = vlaneseq
        %v496 = vshrl.u32 %v495, 7
        %v497 = vsub.s32 %v494, %v496
        %v498 = vrot.slane %v482, %v497
        %v500 = vunpack.c.l.s4 1966171168
        %v501 = vunpack.c.0.s8 %v500
        %v502 = vlaneseq
        %v503 = vshrl.u32 %v502, 7
        %v504 = vsub.s32 %v501, %v503
        %v505 = vrot.slane %v483, %v504
        %v507 = vunpack.c.l.s4 1966171168
        %v508 = vunpack.c.0.s8 %v507
        %v509 = vlaneseq
        %v510 = vshrl.u32 %v509, 7
        %v511 = vsub.s32 %v508, %v510
        %v512 = vrot.slane %v484, %v511
        %v513 = vcombine.high %v491, %v491
        %v514 = vcombine.high %v498, %v498
        %v515 = vcombine.high %v505, %v505
        %v516 = vcombine.high %v512, %v512
        %v517 = vlaneseq
        %v518 = vshrl.u32 %v517, 7
        %v519 = vsub.s32 0, %v518
        %v520 = vrot.slane %v491, %v519
        %v521 = vlaneseq
        %v522 = vshrl.u32 %v521, 7
        %v523 = vsub.s32 0, %v522
        %v524 = vrot.slane %v505, %v523
        %v525 = vlaneseq
        %v526 = vshrl.u32 %v525, 7
        %v527 = vsub.s32 0, %v526
        %v528 = vrot.slane %v513, %v527
        %v529 = vlaneseq
        %v530 = vshrl.u32 %v529, 7
        %v531 = vsub.s32 0, %v530
        %v532 = vrot.slane %v515, %v531
        %v533 = vlaneseq
        %v534 = vshrl.u32 %v533, 7
        %v535 = vsub.s32 0, %v534
        %v536 = vrot.slane %v498, %v535
        %v537 = vlaneseq
        %v538 = vshrl.u32 %v537, 7
        %v539 = vsub.s32 0, %v538
        %v540 = vrot.slane %v512, %v539
        %v541 = vlaneseq
        %v542 = vshrl.u32 %v541, 7
        %v543 = vsub.s32 0, %v542
        %v544 = vrot.slane %v514, %v543
        %v545 = vlaneseq
        %v546 = vshrl.u32 %v545, 7
        %v547 = vsub.s32 0, %v546
        %v548 = vrot.slane %v516, %v547
        %549 = vset.pattern.permute.xlu0 0
        %550 = vperm.xlu0 %549, %v520
        %v551 = vpop.permute.xlu0 %550
        %553 = vset.pattern.permute.xlu0 0
        %554 = vperm.xlu0 %553, %v524
        %v555 = vpop.permute.xlu0 %554
        %557 = vset.pattern.permute.xlu0 0
        %558 = vperm.xlu0 %557, %v528
        %v559 = vpop.permute.xlu0 %558
        %561 = vset.pattern.permute.xlu0 0
        %562 = vperm.xlu0 %561, %v532
        %v563 = vpop.permute.xlu0 %562
        %565 = vset.pattern.permute.xlu0 0
        %566 = vperm.xlu0 %565, %v536
        %v567 = vpop.permute.xlu0 %566
        %569 = vset.pattern.permute.xlu0 0
        %570 = vperm.xlu0 %569, %v540
        %v571 = vpop.permute.xlu0 %570
        %573 = vset.pattern.permute.xlu0 0
        %574 = vperm.xlu0 %573, %v544
        %v575 = vpop.permute.xlu0 %574
        %577 = vset.pattern.permute.xlu0 0
        %578 = vperm.xlu0 %577, %v548
        %v579 = vpop.permute.xlu0 %578
        %v581 = vmul.f32 %v551, %v409
        %v582 = vmul.f32 %v551, %v410
        %v583 = vmul.f32 %v555, %v409
        %v584 = vmul.f32 %v555, %v410
        %v585 = vmul.f32 %v559, %v409
        %v586 = vmul.f32 %v559, %v410
        %v587 = vmul.f32 %v563, %v409
        %v588 = vmul.f32 %v563, %v410
        %v589 = vmul.f32 %v567, %v409
        %v590 = vmul.f32 %v567, %v410
        %v591 = vmul.f32 %v571, %v409
        %v592 = vmul.f32 %v571, %v410
        %v593 = vmul.f32 %v575, %v409
        %v594 = vmul.f32 %v575, %v410
        %v595 = vmul.f32 %v579, %v409
        %v596 = vmul.f32 %v579, %v410
        %v597 = vlaneseq
        %v598 = vshrl.u32 %v597, 7
        %v599 = vsub.s32 0, %v598
        %v600 = vrot.slane %v440, %v599
        %v601 = vlaneseq
        %v602 = vshrl.u32 %v601, 7
        %v603 = vsub.s32 0, %v602
        %v604 = vrot.slane %v454, %v603
        %v605 = vlaneseq
        %v606 = vshrl.u32 %v605, 7
        %v607 = vsub.s32 0, %v606
        %v608 = vrot.slane %v462, %v607
        %v609 = vlaneseq
        %v610 = vshrl.u32 %v609, 7
        %v611 = vsub.s32 0, %v610
        %v612 = vrot.slane %v464, %v611
        %v613 = vlaneseq
        %v614 = vshrl.u32 %v613, 7
        %v615 = vsub.s32 0, %v614
        %v616 = vrot.slane %v447, %v615
        %v617 = vlaneseq
        %v618 = vshrl.u32 %v617, 7
        %v619 = vsub.s32 0, %v618
        %v620 = vrot.slane %v461, %v619
        %v621 = vlaneseq
        %v622 = vshrl.u32 %v621, 7
        %v623 = vsub.s32 0, %v622
        %v624 = vrot.slane %v463, %v623
        %v625 = vlaneseq
        %v626 = vshrl.u32 %v625, 7
        %v627 = vsub.s32 0, %v626
        %v628 = vrot.slane %v465, %v627
        %629 = vset.pattern.permute.xlu0 0
        %630 = vperm.xlu0 %629, %v600
        %v631 = vpop.permute.xlu0 %630
        %633 = vset.pattern.permute.xlu0 0
        %634 = vperm.xlu0 %633, %v604
        %v635 = vpop.permute.xlu0 %634
        %637 = vset.pattern.permute.xlu0 0
        %638 = vperm.xlu0 %637, %v608
        %v639 = vpop.permute.xlu0 %638
        %641 = vset.pattern.permute.xlu0 0
        %642 = vperm.xlu0 %641, %v612
        %v643 = vpop.permute.xlu0 %642
        %645 = vset.pattern.permute.xlu0 0
        %646 = vperm.xlu0 %645, %v616
        %v647 = vpop.permute.xlu0 %646
        %649 = vset.pattern.permute.xlu0 0
        %650 = vperm.xlu0 %649, %v620
        %v651 = vpop.permute.xlu0 %650
        %653 = vset.pattern.permute.xlu0 0
        %654 = vperm.xlu0 %653, %v624
        %v655 = vpop.permute.xlu0 %654
        %657 = vset.pattern.permute.xlu0 0
        %658 = vperm.xlu0 %657, %v628
        %v659 = vpop.permute.xlu0 %658
        %v661 = vadd.f32 %v631, %v581
        %v662 = vadd.f32 %v631, %v582
        %v663 = vadd.f32 %v635, %v583
        %v664 = vadd.f32 %v635, %v584
        %v665 = vadd.f32 %v639, %v585
        %v666 = vadd.f32 %v639, %v586
        %v667 = vadd.f32 %v643, %v587
        %v668 = vadd.f32 %v643, %v588
        %v669 = vadd.f32 %v647, %v589
        %v670 = vadd.f32 %v647, %v590
        %v671 = vadd.f32 %v651, %v591
        %v672 = vadd.f32 %v651, %v592
        %v673 = vadd.f32 %v655, %v593
        %v674 = vadd.f32 %v655, %v594
        %v675 = vadd.f32 %v659, %v595
        %v676 = vadd.f32 %v659, %v596
        %s677 = scalar_lea.vmem %s2, 8
        %v678 = vld [vmem:[%s677] sm:$0xff]
        %v680 = vcombine.high %v678, %v678
        %v682 = vunpack.c.l.s4 1966171168
        %v683 = vunpack.c.0.s8 %v682
        %v684 = vlaneseq
        %v685 = vshrl.u32 %v684, 7
        %v686 = vsub.s32 %v683, %v685
        %v687 = vrot.slane %v678, %v686
        %v689 = vunpack.c.l.s4 1966171168
        %v690 = vunpack.c.0.s8 %v689
        %v691 = vlaneseq
        %v692 = vshrl.u32 %v691, 7
        %v693 = vsub.s32 %v690, %v692
        %v694 = vrot.slane %v680, %v693
        %v695 = vcombine.high %v687, %v687
        %v696 = vcombine.high %v694, %v694
        %v698 = vunpack.c.l.s4 1966171168
        %v699 = vunpack.c.0.s8 %v698
        %v700 = vlaneseq
        %v701 = vshrl.u32 %v700, 7
        %v702 = vsub.s32 %v699, %v701
        %v703 = vrot.slane %v687, %v702
        %v705 = vunpack.c.l.s4 1966171168
        %v706 = vunpack.c.0.s8 %v705
        %v707 = vlaneseq
        %v708 = vshrl.u32 %v707, 7
        %v709 = vsub.s32 %v706, %v708
        %v710 = vrot.slane %v694, %v709
        %v712 = vunpack.c.l.s4 1966171168
        %v713 = vunpack.c.0.s8 %v712
        %v714 = vlaneseq
        %v715 = vshrl.u32 %v714, 7
        %v716 = vsub.s32 %v713, %v715
        %v717 = vrot.slane %v695, %v716
        %v719 = vunpack.c.l.s4 1966171168
        %v720 = vunpack.c.0.s8 %v719
        %v721 = vlaneseq
        %v722 = vshrl.u32 %v721, 7
        %v723 = vsub.s32 %v720, %v722
        %v724 = vrot.slane %v696, %v723
        %v725 = vcombine.high %v703, %v703
        %v726 = vcombine.high %v710, %v710
        %v727 = vcombine.high %v717, %v717
        %v728 = vcombine.high %v724, %v724
        %v729 = vlaneseq
        %v730 = vshrl.u32 %v729, 7
        %v731 = vsub.s32 0, %v730
        %v732 = vrot.slane %v703, %v731
        %v733 = vlaneseq
        %v734 = vshrl.u32 %v733, 7
        %v735 = vsub.s32 0, %v734
        %v736 = vrot.slane %v717, %v735
        %v737 = vlaneseq
        %v738 = vshrl.u32 %v737, 7
        %v739 = vsub.s32 0, %v738
        %v740 = vrot.slane %v725, %v739
        %v741 = vlaneseq
        %v742 = vshrl.u32 %v741, 7
        %v743 = vsub.s32 0, %v742
        %v744 = vrot.slane %v727, %v743
        %v745 = vlaneseq
        %v746 = vshrl.u32 %v745, 7
        %v747 = vsub.s32 0, %v746
        %v748 = vrot.slane %v710, %v747
        %v749 = vlaneseq
        %v750 = vshrl.u32 %v749, 7
        %v751 = vsub.s32 0, %v750
        %v752 = vrot.slane %v724, %v751
        %v753 = vlaneseq
        %v754 = vshrl.u32 %v753, 7
        %v755 = vsub.s32 0, %v754
        %v756 = vrot.slane %v726, %v755
        %v757 = vlaneseq
        %v758 = vshrl.u32 %v757, 7
        %v759 = vsub.s32 0, %v758
        %v760 = vrot.slane %v728, %v759
        %761 = vset.pattern.permute.xlu0 0
        %762 = vperm.xlu0 %761, %v732
        %v763 = vpop.permute.xlu0 %762
        %765 = vset.pattern.permute.xlu0 0
        %766 = vperm.xlu0 %765, %v736
        %v767 = vpop.permute.xlu0 %766
        %769 = vset.pattern.permute.xlu0 0
        %770 = vperm.xlu0 %769, %v740
        %v771 = vpop.permute.xlu0 %770
        %773 = vset.pattern.permute.xlu0 0
        %774 = vperm.xlu0 %773, %v744
        %v775 = vpop.permute.xlu0 %774
        %777 = vset.pattern.permute.xlu0 0
        %778 = vperm.xlu0 %777, %v748
        %v779 = vpop.permute.xlu0 %778
        %781 = vset.pattern.permute.xlu0 0
        %782 = vperm.xlu0 %781, %v752
        %v783 = vpop.permute.xlu0 %782
        %785 = vset.pattern.permute.xlu0 0
        %786 = vperm.xlu0 %785, %v756
        %v787 = vpop.permute.xlu0 %786
        %789 = vset.pattern.permute.xlu0 0
        %790 = vperm.xlu0 %789, %v760
        %v791 = vpop.permute.xlu0 %790
        %v793 = vmul.f32 %v763, %v411
        %v794 = vmul.f32 %v763, %v412
        %v795 = vmul.f32 %v767, %v411
        %v796 = vmul.f32 %v767, %v412
        %v797 = vmul.f32 %v771, %v411
        %v798 = vmul.f32 %v771, %v412
        %v799 = vmul.f32 %v775, %v411
        %v800 = vmul.f32 %v775, %v412
        %v801 = vmul.f32 %v779, %v411
        %v802 = vmul.f32 %v779, %v412
        %v803 = vmul.f32 %v783, %v411
        %v804 = vmul.f32 %v783, %v412
        %v805 = vmul.f32 %v787, %v411
        %v806 = vmul.f32 %v787, %v412
        %v807 = vmul.f32 %v791, %v411
        %v808 = vmul.f32 %v791, %v412
        %v809 = vadd.f32 %v661, %v793
        %v810 = vadd.f32 %v662, %v794
        %v811 = vadd.f32 %v663, %v795
        %v812 = vadd.f32 %v664, %v796
        %v813 = vadd.f32 %v665, %v797
        %v814 = vadd.f32 %v666, %v798
        %v815 = vadd.f32 %v667, %v799
        %v816 = vadd.f32 %v668, %v800
        %v817 = vadd.f32 %v669, %v801
        %v818 = vadd.f32 %v670, %v802
        %v819 = vadd.f32 %v671, %v803
        %v820 = vadd.f32 %v672, %v804
        %v821 = vadd.f32 %v673, %v805
        %v822 = vadd.f32 %v674, %v806
        %v823 = vadd.f32 %v675, %v807
        %v824 = vadd.f32 %v676, %v808
        %s825 = scalar_lea.vmem %s2, 16
        %v826 = vld [vmem:[%s825] sm:$0xff]
        %v828 = vcombine.high %v826, %v826
        %v830 = vunpack.c.l.s4 1966171168
        %v831 = vunpack.c.0.s8 %v830
        %v832 = vlaneseq
        %v833 = vshrl.u32 %v832, 7
        %v834 = vsub.s32 %v831, %v833
        %v835 = vrot.slane %v826, %v834
        %v837 = vunpack.c.l.s4 1966171168
        %v838 = vunpack.c.0.s8 %v837
        %v839 = vlaneseq
        %v840 = vshrl.u32 %v839, 7
        %v841 = vsub.s32 %v838, %v840
        %v842 = vrot.slane %v828, %v841
        %v843 = vcombine.high %v835, %v835
        %v844 = vcombine.high %v842, %v842
        %v846 = vunpack.c.l.s4 1966171168
        %v847 = vunpack.c.0.s8 %v846
        %v848 = vlaneseq
        %v849 = vshrl.u32 %v848, 7
        %v850 = vsub.s32 %v847, %v849
        %v851 = vrot.slane %v835, %v850
        %v853 = vunpack.c.l.s4 1966171168
        %v854 = vunpack.c.0.s8 %v853
        %v855 = vlaneseq
        %v856 = vshrl.u32 %v855, 7
        %v857 = vsub.s32 %v854, %v856
        %v858 = vrot.slane %v842, %v857
        %v860 = vunpack.c.l.s4 1966171168
        %v861 = vunpack.c.0.s8 %v860
        %v862 = vlaneseq
        %v863 = vshrl.u32 %v862, 7
        %v864 = vsub.s32 %v861, %v863
        %v865 = vrot.slane %v843, %v864
        %v867 = vunpack.c.l.s4 1966171168
        %v868 = vunpack.c.0.s8 %v867
        %v869 = vlaneseq
        %v870 = vshrl.u32 %v869, 7
        %v871 = vsub.s32 %v868, %v870
        %v872 = vrot.slane %v844, %v871
        %v873 = vcombine.high %v851, %v851
        %v874 = vcombine.high %v858, %v858
        %v875 = vcombine.high %v865, %v865
        %v876 = vcombine.high %v872, %v872
        %v877 = vlaneseq
        %v878 = vshrl.u32 %v877, 7
        %v879 = vsub.s32 0, %v878
        %v880 = vrot.slane %v851, %v879
        %v881 = vlaneseq
        %v882 = vshrl.u32 %v881, 7
        %v883 = vsub.s32 0, %v882
        %v884 = vrot.slane %v865, %v883
        %v885 = vlaneseq
        %v886 = vshrl.u32 %v885, 7
        %v887 = vsub.s32 0, %v886
        %v888 = vrot.slane %v873, %v887
        %v889 = vlaneseq
        %v890 = vshrl.u32 %v889, 7
        %v891 = vsub.s32 0, %v890
        %v892 = vrot.slane %v875, %v891
        %v893 = vlaneseq
        %v894 = vshrl.u32 %v893, 7
        %v895 = vsub.s32 0, %v894
        %v896 = vrot.slane %v858, %v895
        %v897 = vlaneseq
        %v898 = vshrl.u32 %v897, 7
        %v899 = vsub.s32 0, %v898
        %v900 = vrot.slane %v872, %v899
        %v901 = vlaneseq
        %v902 = vshrl.u32 %v901, 7
        %v903 = vsub.s32 0, %v902
        %v904 = vrot.slane %v874, %v903
        %v905 = vlaneseq
        %v906 = vshrl.u32 %v905, 7
        %v907 = vsub.s32 0, %v906
        %v908 = vrot.slane %v876, %v907
        %909 = vset.pattern.permute.xlu0 0
        %910 = vperm.xlu0 %909, %v880
        %v911 = vpop.permute.xlu0 %910
        %913 = vset.pattern.permute.xlu0 0
        %914 = vperm.xlu0 %913, %v884
        %v915 = vpop.permute.xlu0 %914
        %917 = vset.pattern.permute.xlu0 0
        %918 = vperm.xlu0 %917, %v888
        %v919 = vpop.permute.xlu0 %918
        %921 = vset.pattern.permute.xlu0 0
        %922 = vperm.xlu0 %921, %v892
        %v923 = vpop.permute.xlu0 %922
        %925 = vset.pattern.permute.xlu0 0
        %926 = vperm.xlu0 %925, %v896
        %v927 = vpop.permute.xlu0 %926
        %929 = vset.pattern.permute.xlu0 0
        %930 = vperm.xlu0 %929, %v900
        %v931 = vpop.permute.xlu0 %930
        %933 = vset.pattern.permute.xlu0 0
        %934 = vperm.xlu0 %933, %v904
        %v935 = vpop.permute.xlu0 %934
        %937 = vset.pattern.permute.xlu0 0
        %938 = vperm.xlu0 %937, %v908
        %v939 = vpop.permute.xlu0 %938
        %v941 = vmul.f32 %v911, %v413
        %v942 = vmul.f32 %v911, %v414
        %v943 = vmul.f32 %v915, %v413
        %v944 = vmul.f32 %v915, %v414
        %v945 = vmul.f32 %v919, %v413
        %v946 = vmul.f32 %v919, %v414
        %v947 = vmul.f32 %v923, %v413
        %v948 = vmul.f32 %v923, %v414
        %v949 = vmul.f32 %v927, %v413
        %v950 = vmul.f32 %v927, %v414
        %v951 = vmul.f32 %v931, %v413
        %v952 = vmul.f32 %v931, %v414
        %v953 = vmul.f32 %v935, %v413
        %v954 = vmul.f32 %v935, %v414
        %v955 = vmul.f32 %v939, %v413
        %v956 = vmul.f32 %v939, %v414
        %v957 = vadd.f32 %v809, %v941
        %v958 = vadd.f32 %v810, %v942
        %v959 = vadd.f32 %v811, %v943
        %v960 = vadd.f32 %v812, %v944
        %v961 = vadd.f32 %v813, %v945
        %v962 = vadd.f32 %v814, %v946
        %v963 = vadd.f32 %v815, %v947
        %v964 = vadd.f32 %v816, %v948
        %v965 = vadd.f32 %v817, %v949
        %v966 = vadd.f32 %v818, %v950
        %v967 = vadd.f32 %v819, %v951
        %v968 = vadd.f32 %v820, %v952
        %v969 = vadd.f32 %v821, %v953
        %v970 = vadd.f32 %v822, %v954
        %v971 = vadd.f32 %v823, %v955
        %v972 = vadd.f32 %v824, %v956
        %v973 = vmax.f32 %v957, 0.0
        %v974 = vmax.f32 %v958, 0.0
        %v975 = vmax.f32 %v959, 0.0
        %v976 = vmax.f32 %v960, 0.0
        %v977 = vmax.f32 %v961, 0.0
        %v978 = vmax.f32 %v962, 0.0
        %v979 = vmax.f32 %v963, 0.0
        %v980 = vmax.f32 %v964, 0.0
        %v981 = vmax.f32 %v965, 0.0
        %v982 = vmax.f32 %v966, 0.0
        %v983 = vmax.f32 %v967, 0.0
        %v984 = vmax.f32 %v968, 0.0
        %v985 = vmax.f32 %v969, 0.0
        %v986 = vmax.f32 %v970, 0.0
        %v987 = vmax.f32 %v971, 0.0
        %v988 = vmax.f32 %v972, 0.0
        %vm989 = vcmask 146432
        %990 = vst.msk [vmem:[%s296] sm:$0xff] %vm989, %v973
        %991 = vst.msk [vmem:[%s296 + $0x8] sm:$0xff] %vm989, %v974
        %992 = vst.msk [vmem:[%s296 + $0x10] sm:$0xff] %vm989, %v975
        %993 = vst.msk [vmem:[%s296 + $0x18] sm:$0xff] %vm989, %v976
        %994 = vst.msk [vmem:[%s296 + $0x20] sm:$0xff] %vm989, %v977
        %995 = vst.msk [vmem:[%s296 + $0x28] sm:$0xff] %vm989, %v978
        %996 = vst.msk [vmem:[%s296 + $0x30] sm:$0xff] %vm989, %v979
        %997 = vst.msk [vmem:[%s296 + $0x38] sm:$0xff] %vm989, %v980
        %998 = vst.msk [vmem:[%s296 + $0x40] sm:$0xff] %vm989, %v981
        %999 = vst.msk [vmem:[%s296 + $0x48] sm:$0xff] %vm989, %v982
        %1000 = vst.msk [vmem:[%s296 + $0x50] sm:$0xff] %vm989, %v983
        %1001 = vst.msk [vmem:[%s296 + $0x58] sm:$0xff] %vm989, %v984
        %1002 = vst.msk [vmem:[%s296 + $0x60] sm:$0xff] %vm989, %v985
        %1003 = vst.msk [vmem:[%s296 + $0x68] sm:$0xff] %vm989, %v986
        %1004 = vst.msk [vmem:[%s296 + $0x70] sm:$0xff] %vm989, %v987
        %1005 = vst.msk [vmem:[%s296 + $0x78] sm:$0xff] %vm989, %v988
        %s1006 = sand.u32 %s157, 1
        %s1007 = sand.u32 %s157, 1
        %s1008 = smul.addr %s1007, 128
        %s1009 = scalar_lea.vmem [#allocation6], %s1008
        // Predicated region
        $region45: #{model_forward.1} parent=35 // pred_check
          %p1010 = pneg %p167
        $region46: #{model_forward.1} parent=35 // pred_check_branch
          %1012 = sbr.rel (%p1010) target = $region48
        $region47: #{model_forward.1} parent=35 // pred_region
          %s1013 = smul.u32 2, %s26
          %s1014 = ssub.s32 3, %s1013
          %p1015 = scmp.lt.s32.totalorder %s1014, 2
          %s1016 = scalar_select %p1015, %s1014, 2
          %s1017 = smul.u32 1024, %s1016
          %p1018 = scmp.ne.s32.totalorder 0, %s1017
          %s1019 = smul.addr %s25, 24
          %s1020 = sadd.s32 %s1013, %s1019
          %s1021 = smul.addr %s1020, 8
          %s1022 = scalar_lea.vmem %s4, %s1021
          // Predicated region
          $region49: #{model_forward.1} parent=47 // pred_check
            %p1023 = pneg %p1018
          $region50: #{model_forward.1} parent=47 // pred_check_branch
            %1025 = sbr.rel (%p1023) target = $region52
          $region51: #{model_forward.1} parent=47 // pred_region
            // Predicated region
            $region53: #{model_forward.1} parent=51 // pred_check
              _
            $region54: #{model_forward.1} parent=51 // pred_check_branch
              %1027 = sbr.rel (0) target = $region56
            $region55: #{model_forward.1} parent=51 // pred_region
              // Predicated region
              $region75: #{model_forward.1} parent=55 // pred_check
                _
              $region76: #{model_forward.1} parent=55 // pred_check_branch
                %1121 = sbr.rel (0) target = $region78
              $region77: #{model_forward.1} parent=55 // pred_region
                %s1122 = sshrl.u32 %s1016, 1
                // While loop
                $region79: #{model_forward.1} parent=77 // loop_pre_header
                  _
                $region80: #{model_forward.1} parent=77 // loop_header
                  %s1124 = sphi 0, %s1126
                  %p1125 = scmp.ge.s32.totalorder %s1124, %s1122
                  %s1129 = sphi 0, %s1166
                  %s1130 = sphi %s1009, %s1169
                  %s1131 = sphi %s1022, %s1170
                $region81: #{model_forward.1} parent=77 // loop_header_branch
                  %1128 = sbr.rel (%p1125) target = $region85
                $region82: #{model_forward.1} parent=77 // loop_body
                  %v1132 = vld [vmem:[%s1130] sm:$0xff]
                  %1133 = vst [vmem:[%s1131] sm:$0xff] %v1132
                  %v1134 = vld [vmem:[%s1130 + $0x8] sm:$0xff]
                  %1135 = vst [vmem:[%s1131 + $0x8] sm:$0xff] %v1134
                  %v1136 = vld [vmem:[%s1130 + $0x10] sm:$0xff]
                  %1137 = vst [vmem:[%s1131 + $0x18] sm:$0xff] %v1136
                  %v1138 = vld [vmem:[%s1130 + $0x18] sm:$0xff]
                  %1139 = vst [vmem:[%s1131 + $0x20] sm:$0xff] %v1138
                  %v1140 = vld [vmem:[%s1130 + $0x20] sm:$0xff]
                  %1141 = vst [vmem:[%s1131 + $0x30] sm:$0xff] %v1140
                  %v1142 = vld [vmem:[%s1130 + $0x28] sm:$0xff]
                  %1143 = vst [vmem:[%s1131 + $0x38] sm:$0xff] %v1142
                  %v1144 = vld [vmem:[%s1130 + $0x30] sm:$0xff]
                  %1145 = vst [vmem:[%s1131 + $0x48] sm:$0xff] %v1144
                  %v1146 = vld [vmem:[%s1130 + $0x38] sm:$0xff]
                  %1147 = vst [vmem:[%s1131 + $0x50] sm:$0xff] %v1146
                  %v1148 = vld [vmem:[%s1130 + $0x40] sm:$0xff]
                  %1149 = vst [vmem:[%s1131 + $0x60] sm:$0xff] %v1148
                  %v1150 = vld [vmem:[%s1130 + $0x48] sm:$0xff]
                  %1151 = vst [vmem:[%s1131 + $0x68] sm:$0xff] %v1150
                  %v1152 = vld [vmem:[%s1130 + $0x50] sm:$0xff]
                  %1153 = vst [vmem:[%s1131 + $0x78] sm:$0xff] %v1152
                  %v1154 = vld [vmem:[%s1130 + $0x58] sm:$0xff]
                  %1155 = vst [vmem:[%s1131 + $0x80] sm:$0xff] %v1154
                  %v1156 = vld [vmem:[%s1130 + $0x60] sm:$0xff]
                  %1157 = vst [vmem:[%s1131 + $0x90] sm:$0xff] %v1156
                  %v1158 = vld [vmem:[%s1130 + $0x68] sm:$0xff]
                  %1159 = vst [vmem:[%s1131 + $0x98] sm:$0xff] %v1158
                  %v1160 = vld [vmem:[%s1130 + $0x70] sm:$0xff]
                  %1161 = vst [vmem:[%s1131 + $0xa8] sm:$0xff] %v1160
                  %v1162 = vld [vmem:[%s1130 + $0x78] sm:$0xff]
                  %1163 = vst [vmem:[%s1131 + $0xb0] sm:$0xff] %v1162
                  %s1164 = sadd.s32 1, %s1129
                  %p1165 = scmp.ge.s32.totalorder %s1164, %s1122
                  %s1166 = scalar_select %p1165, 0, %s1164
                  %s1167 = smul.u32 %s1166, 16
                  %s1168 = smul.u32 %s1166, 16
                  %s1169 = scalar_lea.vmem %s1009, %s1167 [#allocation6]
                  %s1170 = scalar_lea.vmem %s1022, %s1168
                $region83: #{model_forward.1} parent=77 // loop_footer
                  %s1126 = sadd.s32 %s1124, 1
                $region84: #{model_forward.1} parent=77 // loop_footer_branch
                  %1123 = sbr.rel target = $region80
                $region85: #{model_forward.1} parent=77 // loop_exit
                  _
                %s1171 = sshrl.u32 %s1016, 1
                %s1172 = sand.u32 %s1016, 1
                %s1173 = smul.u32 %s1171, 2
                %s1174 = smul.u32 8, %s1173
                %s1175 = scalar_lea.vmem %s1009, %s1174 [#allocation6]
                %s1176 = smul.u32 8, %s1173
                %s1177 = scalar_lea.vmem %s1022, %s1176
                // While loop
                $region86: #{model_forward.1} parent=77 // loop_pre_header
                  _
                $region87: #{model_forward.1} parent=77 // loop_header
                  %s1179 = sphi 0, %s1181
                  %p1180 = scmp.ge.s32.totalorder %s1179, %s1172
                  %s1184 = sphi 0, %s1205
                  %s1185 = sphi %s1175, %s1208
                  %s1186 = sphi %s1177, %s1209
                $region88: #{model_forward.1} parent=77 // loop_header_branch
                  %1183 = sbr.rel (%p1180) target = $region92
                $region89: #{model_forward.1} parent=77 // loop_body
                  %v1187 = vld [vmem:[%s1185] sm:$0xff]
                  %1188 = vst [vmem:[%s1186] sm:$0xff] %v1187
                  %v1189 = vld [vmem:[%s1185 + $0x10] sm:$0xff]
                  %1190 = vst [vmem:[%s1186 + $0x18] sm:$0xff] %v1189
                  %v1191 = vld [vmem:[%s1185 + $0x20] sm:$0xff]
                  %1192 = vst [vmem:[%s1186 + $0x30] sm:$0xff] %v1191
                  %v1193 = vld [vmem:[%s1185 + $0x30] sm:$0xff]
                  %1194 = vst [vmem:[%s1186 + $0x48] sm:$0xff] %v1193
                  %v1195 = vld [vmem:[%s1185 + $0x40] sm:$0xff]
                  %1196 = vst [vmem:[%s1186 + $0x60] sm:$0xff] %v1195
                  %v1197 = vld [vmem:[%s1185 + $0x50] sm:$0xff]
                  %1198 = vst [vmem:[%s1186 + $0x78] sm:$0xff] %v1197
                  %v1199 = vld [vmem:[%s1185 + $0x60] sm:$0xff]
                  %1200 = vst [vmem:[%s1186 + $0x90] sm:$0xff] %v1199
                  %v1201 = vld [vmem:[%s1185 + $0x70] sm:$0xff]
                  %1202 = vst [vmem:[%s1186 + $0xa8] sm:$0xff] %v1201
                  %s1203 = sadd.s32 1, %s1184
                  %p1204 = scmp.ge.s32.totalorder %s1203, %s1172
                  %s1205 = scalar_select %p1204, 0, %s1203
                  %s1206 = smul.u32 %s1205, 8
                  %s1207 = smul.u32 %s1205, 8
                  %s1208 = scalar_lea.vmem %s1175, %s1206 [#allocation6]
                  %s1209 = scalar_lea.vmem %s1177, %s1207
                $region90: #{model_forward.1} parent=77 // loop_footer
                  %s1181 = sadd.s32 %s1179, 1
                $region91: #{model_forward.1} parent=77 // loop_footer_branch
                  %1178 = sbr.rel target = $region87
                $region92: #{model_forward.1} parent=77 // loop_exit
                  _
              $region78: #{model_forward.1} parent=55 // pred_fallthru
                _
              // Predicated region
              $region93: #{model_forward.1} parent=55 // pred_check
                _
              $region94: #{model_forward.1} parent=55 // pred_check_branch
                %1211 = sbr.rel target = $region96
              $region95: #{model_forward.1} parent=55 // pred_region
                _
              $region96: #{model_forward.1} parent=55 // pred_fallthru
                _
            $region56: #{model_forward.1} parent=51 // pred_fallthru
              _
            // Predicated region
            $region57: #{model_forward.1} parent=51 // pred_check
              _
            $region58: #{model_forward.1} parent=51 // pred_check_branch
              %1029 = sbr.rel target = $region60
            $region59: #{model_forward.1} parent=51 // pred_region
              %s1031 = ssub.s32 256, 1
              %s1032 = sshrl.u32 %s1016, 1
              // While loop
              $region61: #{model_forward.1} parent=59 // loop_pre_header
                _
              $region62: #{model_forward.1} parent=59 // loop_header
                %s1034 = sphi 0, %s1036
                %p1035 = scmp.ge.s32.totalorder %s1034, %s1032
                %s1039 = sphi 0, %s1076
                %s1040 = sphi %s1009, %s1079
                %s1041 = sphi %s1022, %s1080
              $region63: #{model_forward.1} parent=59 // loop_header_branch
                %1038 = sbr.rel (%p1035) target = $region67
              $region64: #{model_forward.1} parent=59 // loop_body
                %v1042 = vld [vmem:[%s1040] sm:%s1031]
                %1043 = vst [vmem:[%s1041] sm:%s1031] %v1042
                %v1044 = vld [vmem:[%s1040 + $0x8] sm:%s1031]
                %1045 = vst [vmem:[%s1041 + $0x8] sm:%s1031] %v1044
                %v1046 = vld [vmem:[%s1040 + $0x10] sm:%s1031]
                %1047 = vst [vmem:[%s1041 + $0x18] sm:%s1031] %v1046
                %v1048 = vld [vmem:[%s1040 + $0x18] sm:%s1031]
                %1049 = vst [vmem:[%s1041 + $0x20] sm:%s1031] %v1048
                %v1050 = vld [vmem:[%s1040 + $0x20] sm:%s1031]
                %1051 = vst [vmem:[%s1041 + $0x30] sm:%s1031] %v1050
                %v1052 = vld [vmem:[%s1040 + $0x28] sm:%s1031]
                %1053 = vst [vmem:[%s1041 + $0x38] sm:%s1031] %v1052
                %v1054 = vld [vmem:[%s1040 + $0x30] sm:%s1031]
                %1055 = vst [vmem:[%s1041 + $0x48] sm:%s1031] %v1054
                %v1056 = vld [vmem:[%s1040 + $0x38] sm:%s1031]
                %1057 = vst [vmem:[%s1041 + $0x50] sm:%s1031] %v1056
                %v1058 = vld [vmem:[%s1040 + $0x40] sm:%s1031]
                %1059 = vst [vmem:[%s1041 + $0x60] sm:%s1031] %v1058
                %v1060 = vld [vmem:[%s1040 + $0x48] sm:%s1031]
                %1061 = vst [vmem:[%s1041 + $0x68] sm:%s1031] %v1060
                %v1062 = vld [vmem:[%s1040 + $0x50] sm:%s1031]
                %1063 = vst [vmem:[%s1041 + $0x78] sm:%s1031] %v1062
                %v1064 = vld [vmem:[%s1040 + $0x58] sm:%s1031]
                %1065 = vst [vmem:[%s1041 + $0x80] sm:%s1031] %v1064
                %v1066 = vld [vmem:[%s1040 + $0x60] sm:%s1031]
                %1067 = vst [vmem:[%s1041 + $0x90] sm:%s1031] %v1066
                %v1068 = vld [vmem:[%s1040 + $0x68] sm:%s1031]
                %1069 = vst [vmem:[%s1041 + $0x98] sm:%s1031] %v1068
                %v1070 = vld [vmem:[%s1040 + $0x70] sm:%s1031]
                %1071 = vst [vmem:[%s1041 + $0xa8] sm:%s1031] %v1070
                %v1072 = vld [vmem:[%s1040 + $0x78] sm:%s1031]
                %1073 = vst [vmem:[%s1041 + $0xb0] sm:%s1031] %v1072
                %s1074 = sadd.s32 1, %s1039
                %p1075 = scmp.ge.s32.totalorder %s1074, %s1032
                %s1076 = scalar_select %p1075, 0, %s1074
                %s1077 = smul.u32 %s1076, 16
                %s1078 = smul.u32 %s1076, 16
                %s1079 = scalar_lea.vmem %s1009, %s1077 [#allocation6]
                %s1080 = scalar_lea.vmem %s1022, %s1078
              $region65: #{model_forward.1} parent=59 // loop_footer
                %s1036 = sadd.s32 %s1034, 1
              $region66: #{model_forward.1} parent=59 // loop_footer_branch
                %1033 = sbr.rel target = $region62
              $region67: #{model_forward.1} parent=59 // loop_exit
                _
              %s1081 = sshrl.u32 %s1016, 1
              %s1082 = sand.u32 %s1016, 1
              %s1083 = smul.u32 %s1081, 2
              %s1084 = smul.u32 8, %s1083
              %s1085 = scalar_lea.vmem %s1009, %s1084 [#allocation6]
              %s1086 = smul.u32 8, %s1083
              %s1087 = scalar_lea.vmem %s1022, %s1086
              // While loop
              $region68: #{model_forward.1} parent=59 // loop_pre_header
                _
              $region69: #{model_forward.1} parent=59 // loop_header
                %s1089 = sphi 0, %s1091
                %p1090 = scmp.ge.s32.totalorder %s1089, %s1082
                %s1094 = sphi 0, %s1115
                %s1095 = sphi %s1085, %s1118
                %s1096 = sphi %s1087, %s1119
              $region70: #{model_forward.1} parent=59 // loop_header_branch
                %1093 = sbr.rel (%p1090) target = $region74
              $region71: #{model_forward.1} parent=59 // loop_body
                %v1097 = vld [vmem:[%s1095] sm:%s1031]
                %1098 = vst [vmem:[%s1096] sm:%s1031] %v1097
                %v1099 = vld [vmem:[%s1095 + $0x10] sm:%s1031]
                %1100 = vst [vmem:[%s1096 + $0x18] sm:%s1031] %v1099
                %v1101 = vld [vmem:[%s1095 + $0x20] sm:%s1031]
                %1102 = vst [vmem:[%s1096 + $0x30] sm:%s1031] %v1101
                %v1103 = vld [vmem:[%s1095 + $0x30] sm:%s1031]
                %1104 = vst [vmem:[%s1096 + $0x48] sm:%s1031] %v1103
                %v1105 = vld [vmem:[%s1095 + $0x40] sm:%s1031]
                %1106 = vst [vmem:[%s1096 + $0x60] sm:%s1031] %v1105
                %v1107 = vld [vmem:[%s1095 + $0x50] sm:%s1031]
                %1108 = vst [vmem:[%s1096 + $0x78] sm:%s1031] %v1107
                %v1109 = vld [vmem:[%s1095 + $0x60] sm:%s1031]
                %1110 = vst [vmem:[%s1096 + $0x90] sm:%s1031] %v1109
                %v1111 = vld [vmem:[%s1095 + $0x70] sm:%s1031]
                %1112 = vst [vmem:[%s1096 + $0xa8] sm:%s1031] %v1111
                %s1113 = sadd.s32 1, %s1094
                %p1114 = scmp.ge.s32.totalorder %s1113, %s1082
                %s1115 = scalar_select %p1114, 0, %s1113
                %s1116 = smul.u32 %s1115, 8
                %s1117 = smul.u32 %s1115, 8
                %s1118 = scalar_lea.vmem %s1085, %s1116 [#allocation6]
                %s1119 = scalar_lea.vmem %s1087, %s1117
              $region72: #{model_forward.1} parent=59 // loop_footer
                %s1091 = sadd.s32 %s1089, 1
              $region73: #{model_forward.1} parent=59 // loop_footer_branch
                %1088 = sbr.rel target = $region69
              $region74: #{model_forward.1} parent=59 // loop_exit
                _
            $region60: #{model_forward.1} parent=51 // pred_fallthru
              _
          $region52: #{model_forward.1} parent=47 // pred_fallthru
            _
          %1212 = vnop
        $region48: #{model_forward.1} parent=35 // pred_fallthru
          _
      $region36: #{model_forward.1} parent=5 // pred_fallthru
        _
      %p1213 = scmp.le.s32.totalorder 2, %s16
      // Predicated region
      $region97: #{model_forward.1} parent=5 // pred_check
        %p1214 = pneg %p1213
      $region98: #{model_forward.1} parent=5 // pred_check_branch
        %1216 = sbr.rel (%p1214) target = $region100
      $region99: #{model_forward.1} parent=5 // pred_region
        %s1217 = ssub.s32 %s16, 2
        // Predicated region
        $region101: #{model_forward.1} parent=99 // pred_check
          %p1218 = pneg %p173
        $region102: #{model_forward.1} parent=99 // pred_check_branch
          %1220 = sbr.rel (%p1218) target = $region104
        $region103: #{model_forward.1} parent=99 // pred_region
          %s1221 = sand.u32 %s158, 1
          %s1222 = sand.u32 %s158, 1
          %s1223 = smul.addr %s1222, 128
          %s1224 = scalar_lea.vmem [#allocation6], %s1223
        $region104: #{model_forward.1} parent=99 // pred_fallthru
          _
      $region100: #{model_forward.1} parent=5 // pred_fallthru
        _
    $region6: #{model_forward.1} parent=1 // loop_footer
      %s20 = sadd.s32 1, %s16
    $region7: #{model_forward.1} parent=1 // loop_footer_branch
      %15 = sbr.rel target = $region3
    $region8: #{model_forward.1} parent=1 // loop_exit
      _
    %1225 = vsyncpa [#allocation3], 1
    %s1226 = scalar_lea.sflag [#allocation3], 1
    %1227 = vsyncpa %s1226, 1
    %1228 = vsyncpa [#allocation5], 1
    %s1229 = scalar_lea.sflag [#allocation5], 1
    %1230 = vsyncpa %s1229, 1

</llo_original>
